<compile_context>
chip_gen: v7x
topology: tpu7x:2x2x1
jax: 0.10.0
libtpu: 0.0.40
codegen_flags: <defaults>
</compile_context>

<pallas_src>
import functools

import jax
import jax.numpy as jnp
from jax.experimental import pallas as pl
from jax.experimental.pallas import tpu as pltpu


def _gae_forward_kernel(x_ref, w1_ref, b1_ref, wh_ref, bh_ref, out_ref, *,
                        num_outputs):
    x = x_ref[...]

    # fc + relu  (bias add / relu in f32 regardless of operand dtype)
    h = jnp.dot(x, w1_ref[...], preferred_element_type=jnp.float32) + b1_ref[...]
    h = jnp.maximum(h, 0.0)

    # fused actor+critic heads: one MXU pass over (hidden, num_outputs + 1)
    heads = jnp.dot(h.astype(wh_ref.dtype), wh_ref[...],
                    preferred_element_type=jnp.float32) + bh_ref[...]

    # Lane mask selecting the policy columns (value is the last column).
    col = jax.lax.broadcasted_iota(jnp.int32, heads.shape, 1)
    is_policy = col < num_outputs

    # Row-wise numerically-stable softmax over the policy lanes only,
    # normalized in-place with a VALU select (no concat / lane shuffle).
    m = jnp.max(jnp.where(is_policy, heads, -jnp.inf), axis=-1, keepdims=True)
    e = jnp.where(is_policy, jnp.exp(heads - m), 0.0)
    denom = jnp.sum(e, axis=-1, keepdims=True)
    fused = jnp.where(is_policy, e / denom, heads)   # [softmax(policy) | value]

    # Lane-dense writeback: (tb, n_heads) -> (n_heads, tb) so the 128-lane
    # axis of the store/HBM writeback is the (large) batch dimension.
    out_ref[...] = fused.T.astype(out_ref.dtype)


def gae_forward(x, w1, b1, wa, ba, wc, bc, *, block_batch=2048, use_bf16=False):
    """policy, value = GAE.forward(x).

    x:  (batch, num_inputs) f32
    w1: (num_inputs, 128), b1: (1, 128)
    wa: (128, num_outputs), ba: (1, num_outputs)
    wc: (128, 1),           bc: (1, 1)
    """
    batch, num_inputs = x.shape
    hidden = w1.shape[1]
    num_outputs = wa.shape[1]
    n_heads = num_outputs + 1

    # Fuse the two lane-sparse head matmuls into a single one (weights are
    # VMEM-resident, so this concat cost is tiny and amortized by jit caching).
    w_heads = jnp.concatenate([wa, wc], axis=1)   # (hidden, num_outputs + 1)
    b_heads = jnp.concatenate([ba, bc], axis=1)   # (1, num_outputs + 1)

    if use_bf16:
        # bf16 operands, f32 accumulation: big MXU win on v5e/v6e.
        x_in = x.astype(jnp.bfloat16)
        w1_in = w1.astype(jnp.bfloat16)
        wh_in = w_heads.astype(jnp.bfloat16)
    else:
        x_in, w1_in, wh_in = x, w1, w_heads

    # Batch tile: one full-extent block for small batches (always a legal
    # block shape), otherwise a large sublane-aligned tile.  No jnp.pad:
    # a non-divisible last block is handled by Pallas masking.
    assert block_batch % 8 == 0
    tb = batch if batch <= block_batch else block_batch
    grid = (pl.cdiv(batch, tb),)

    kernel = functools.partial(_gae_forward_kernel, num_outputs=num_outputs)
    out_t = pl.pallas_call(
        kernel,
        out_shape=jax.ShapeDtypeStruct((n_heads, batch), jnp.float32),
        grid=grid,
        in_specs=[
            pl.BlockSpec((tb, num_inputs), lambda i: (i, 0)),      # x tile
            pl.BlockSpec((num_inputs, hidden), lambda i: (0, 0)),  # w1 (resident)
            pl.BlockSpec((1, hidden), lambda i: (0, 0)),           # b1 (resident)
            pl.BlockSpec((hidden, n_heads), lambda i: (0, 0)),     # fused heads W
            pl.BlockSpec((1, n_heads), lambda i: (0, 0)),          # fused heads b
        ],
        # Transposed, lane-dense output slab: lanes = batch.
        out_specs=pl.BlockSpec((n_heads, tb), lambda i: (0, i)),
        compiler_params=pltpu.CompilerParams(
            dimension_semantics=("parallel",),   # megacore / v7x dual-TC sharding
        ),
    )(x_in, w1_in, b1, wh_in, b_heads)

    out = out_t.T                                 # (batch, n_heads)
    policy = out[:, :num_outputs]
    value = out[:, num_outputs:]
    return policy, value


def xavier_uniform(key, fan_in, fan_out):
    bound = (6.0 / (fan_in + fan_out)) ** 0.5
    return jax.random.uniform(key, (fan_in, fan_out), jnp.float32, -bound, bound)


def linear_bias(key, fan_in, fan_out):
    # PyTorch nn.Linear default bias init: U(-1/sqrt(fan_in), 1/sqrt(fan_in))
    bound = 1.0 / (fan_in ** 0.5)
    return jax.random.uniform(key, (1, fan_out), jnp.float32, -bound, bound)


def reference_forward(x, w1, b1, wa, ba, wc, bc):
    hp = jax.lax.Precision.HIGHEST
    h = jnp.maximum(jnp.dot(x, w1, precision=hp) + b1, 0.0)
    policy = jax.nn.softmax(jnp.dot(h, wa, precision=hp) + ba, axis=-1)
    value = jnp.dot(h, wc, precision=hp) + bc
    return policy, value


if __name__ == "__main__":
    num_inputs = 32    # observation dim
    num_outputs = 4    # action dim
    hidden = 128
    batch = 8

    key = jax.random.PRNGKey(0)
    k_x, k_w1, k_b1, k_wa, k_ba, k_wc, k_bc = jax.random.split(key, 7)

    x = jax.random.normal(k_x, (batch, num_inputs), jnp.float32)

    w1 = xavier_uniform(k_w1, num_inputs, hidden)
    b1 = linear_bias(k_b1, num_inputs, hidden)
    wa = xavier_uniform(k_wa, hidden, num_outputs)
    ba = linear_bias(k_ba, hidden, num_outputs)
    wc = xavier_uniform(k_wc, hidden, 1)
    bc = linear_bias(k_bc, hidden, 1)

    policy, value = gae_forward(x, w1, b1, wa, ba, wc, bc)
    jax.block_until_ready((policy, value))

    # Sanity check against a pure-JAX reference.
    ref_policy, ref_value = reference_forward(x, w1, b1, wa, ba, wc, bc)
    assert policy.shape == (batch, num_outputs)
    assert value.shape == (batch, 1)
    assert jnp.allclose(policy, ref_policy, atol=1e-4, rtol=1e-4)
    assert jnp.allclose(value, ref_value, atol=1e-4, rtol=1e-4)
    assert jnp.allclose(jnp.sum(policy, axis=-1), 1.0, atol=1e-4)

    print("KERNEL_OK")
</pallas_src>

<mosaic_0001>
module attributes {stable_mosaic.version = 11 : i64} {
  func.func @_gae_forward_kernel(%arg0: i32, %arg1: memref<8x32xf32, #tpu.memory_space<vmem>>, %arg2: memref<32x128xf32, #tpu.memory_space<vmem>>, %arg3: memref<1x128xf32, #tpu.memory_space<vmem>>, %arg4: memref<128x5xf32, #tpu.memory_space<vmem>>, %arg5: memref<1x5xf32, #tpu.memory_space<vmem>>, %arg6: memref<5x8xf32, #tpu.memory_space<vmem>>) attributes {dimension_semantics = [#tpu.dimension_semantics<parallel>], iteration_bounds = array<i64: 1>, scalar_prefetch = 0 : i64, scratch_operands = 0 : i64, tpu.core_type = #tpu.core_type<tc>, window_params = [{transform_indices = @transform_0, window_bounds = array<i64: 8, 32>}, {pipeline_mode = #tpu.pipeline_mode<synchronous>, transform_indices = @transform_1, window_bounds = array<i64: 32, 128>}, {pipeline_mode = #tpu.pipeline_mode<synchronous>, transform_indices = @transform_2, window_bounds = array<i64: 1, 128>}, {pipeline_mode = #tpu.pipeline_mode<synchronous>, transform_indices = @transform_3, window_bounds = array<i64: 128, 5>}, {pipeline_mode = #tpu.pipeline_mode<synchronous>, transform_indices = @transform_4, window_bounds = array<i64: 1, 5>}, {transform_indices = @transform_5, window_bounds = array<i64: 5, 8>}]} {
    %c0 = arith.constant 0 : index
    %c0_0 = arith.constant 0 : index
    %0 = vector.load %arg1[%c0, %c0_0] : memref<8x32xf32, #tpu.memory_space<vmem>>, vector<8x32xf32>
    %c0_1 = arith.constant 0 : index
    %c0_2 = arith.constant 0 : index
    %1 = vector.load %arg2[%c0_1, %c0_2] : memref<32x128xf32, #tpu.memory_space<vmem>>, vector<32x128xf32>
    %cst = arith.constant dense<0.000000e+00> : vector<8x128xf32>
    %2 = tpu.matmul %0, %1, %cst {dimension_numbers = #tpu.dot_dimension_numbers<[1], [0], [0], [1], [0, 0, 1, 1], [], []>} : vector<8x32xf32>, vector<32x128xf32>, vector<8x128xf32> -> vector<8x128xf32>
    %c0_3 = arith.constant 0 : index
    %c0_4 = arith.constant 0 : index
    %3 = vector.load %arg3[%c0_3, %c0_4] : memref<1x128xf32, #tpu.memory_space<vmem>>, vector<1x128xf32>
    %4 = vector.broadcast %3 : vector<1x128xf32> to vector<8x128xf32>
    %5 = arith.addf %2, %4 : vector<8x128xf32>
    %cst_5 = arith.constant 0.000000e+00 : f32
    %6 = vector.broadcast %cst_5 : f32 to vector<8x128xf32>
    %7 = arith.maximumf %5, %6 : vector<8x128xf32>
    %c0_6 = arith.constant 0 : index
    %c0_7 = arith.constant 0 : index
    %8 = vector.load %arg4[%c0_6, %c0_7] : memref<128x5xf32, #tpu.memory_space<vmem>>, vector<128x5xf32>
    %cst_8 = arith.constant dense<0.000000e+00> : vector<8x5xf32>
    %9 = tpu.matmul %7, %8, %cst_8 {dimension_numbers = #tpu.dot_dimension_numbers<[1], [0], [0], [1], [0, 0, 1, 1], [], []>} : vector<8x128xf32>, vector<128x5xf32>, vector<8x5xf32> -> vector<8x5xf32>
    %c0_9 = arith.constant 0 : index
    %c0_10 = arith.constant 0 : index
    %10 = vector.load %arg5[%c0_9, %c0_10] : memref<1x5xf32, #tpu.memory_space<vmem>>, vector<1x5xf32>
    %11 = vector.broadcast %10 : vector<1x5xf32> to vector<8x5xf32>
    %12 = arith.addf %9, %11 : vector<8x5xf32>
    %13 = tpu.iota {dimensions = array<i32: 1>} : vector<8x5xi32>
    %c4_i32 = arith.constant 4 : i32
    %14 = vector.broadcast %c4_i32 : i32 to vector<8x5xi32>
    %15 = arith.cmpi slt, %13, %14 : vector<8x5xi32>
    %cst_11 = arith.constant 0xFF800000 : f32
    %16 = vector.broadcast %cst_11 : f32 to vector<8x5xf32>
    %17 = arith.select %15, %12, %16 : vector<8x5xi1>, vector<8x5xf32>
    %cst_12 = arith.constant dense<0xFF800000> : vector<8xf32>
    %18 = vector.multi_reduction <maximumf>, %17, %cst_12 [1] : vector<8x5xf32> to vector<8xf32>
    %19 = vector.shape_cast %18 : vector<8xf32> to vector<8x1xf32>
    %20 = vector.broadcast %19 : vector<8x1xf32> to vector<8x5xf32>
    %21 = arith.subf %12, %20 : vector<8x5xf32>
    %22 = math.exp %21 : vector<8x5xf32>
    %cst_13 = arith.constant 0.000000e+00 : f32
    %23 = vector.broadcast %cst_13 : f32 to vector<8x5xf32>
    %24 = arith.select %15, %22, %23 : vector<8x5xi1>, vector<8x5xf32>
    %cst_14 = arith.constant dense<0.000000e+00> : vector<8xf32>
    %25 = vector.multi_reduction <add>, %24, %cst_14 [1] : vector<8x5xf32> to vector<8xf32>
    %26 = vector.shape_cast %25 : vector<8xf32> to vector<8x1xf32>
    %27 = vector.broadcast %26 : vector<8x1xf32> to vector<8x5xf32>
    %28 = arith.divf %24, %27 : vector<8x5xf32>
    %29 = arith.select %15, %28, %12 : vector<8x5xi1>, vector<8x5xf32>
    %30 = tpu.transpose %29, [1, 0] : vector<8x5xf32> -> vector<5x8xf32>
    %c0_15 = arith.constant 0 : index
    %c0_16 = arith.constant 0 : index
    %31 = vector.load %arg6[%c0_15, %c0_16] : memref<5x8xf32, #tpu.memory_space<vmem>>, vector<5x8xf32>
    tpu.vector_store %arg6[%c0_15, %c0_16], %30 {strides = array<i32>} : memref<5x8xf32, #tpu.memory_space<vmem>>, vector<5x8xf32>,
    return
  }
  func.func @transform_0(%arg0: i32) -> (i32, i32) {
    %c0_i32 = arith.constant 0 : i32
    %c0_i32_0 = arith.constant 0 : i32
    return %arg0, %c0_i32 : i32, i32
  }
  func.func @transform_1(%arg0: i32) -> (i32, i32) {
    %c0_i32 = arith.constant 0 : i32
    %c0_i32_0 = arith.constant 0 : i32
    %c0_i32_1 = arith.constant 0 : i32
    return %c0_i32, %c0_i32_0 : i32, i32
  }
  func.func @transform_2(%arg0: i32) -> (i32, i32) {
    %c0_i32 = arith.constant 0 : i32
    %c0_i32_0 = arith.constant 0 : i32
    %c0_i32_1 = arith.constant 0 : i32
    return %c0_i32, %c0_i32_0 : i32, i32
  }
  func.func @transform_3(%arg0: i32) -> (i32, i32) {
    %c0_i32 = arith.constant 0 : i32
    %c0_i32_0 = arith.constant 0 : i32
    %c0_i32_1 = arith.constant 0 : i32
    return %c0_i32, %c0_i32_0 : i32, i32
  }
  func.func @transform_4(%arg0: i32) -> (i32, i32) {
    %c0_i32 = arith.constant 0 : i32
    %c0_i32_0 = arith.constant 0 : i32
    %c0_i32_1 = arith.constant 0 : i32
    return %c0_i32, %c0_i32_0 : i32, i32
  }
  func.func @transform_5(%arg0: i32) -> (i32, i32) {
    %c0_i32 = arith.constant 0 : i32
    %c0_i32_0 = arith.constant 0 : i32
    return %c0_i32, %arg0 : i32, i32
  }
}

</mosaic_0001>

<llo_original>
// kernel: tpu_custom_call.1
$region0: #{tpu_custom_call.1}
  #allocation0 [shape = 'u32[]', space=smem, size = 0x4, offset = 0x4, fixed_abs, tag = 'smem constant byte address 0x4 - core index']
  #allocation1 [shape = 'u32[144,128]{1,0:T(1,128)}', space=vmem, size = 0x12000, scoped, tag = 'internal scratch']
  %s0 = inlined_call_operand.vmem [shape: f32[8,32], index: 0, kind: input, shape index: {}]
  %s1 = inlined_call_operand.vmem [shape: f32[32,128], index: 1, kind: input, shape index: {}]
  %s2 = inlined_call_operand.vmem [shape: f32[1,128], index: 2, kind: input, shape index: {}]
  %s3 = inlined_call_operand.vmem [shape: f32[128,5], index: 3, kind: input, shape index: {}]
  %s4 = inlined_call_operand.vmem [shape: f32[1,5], index: 4, kind: input, shape index: {}]
  %s5 = inlined_call_operand.hbm [shape: f32[5,8], index: 5, kind: output, shape index: {}]
  %s6 = sld [smem:[#allocation0]]
  $region30: #{tpu_custom_call.1} parent=0
    _
  %s8 = ssub.s32 1, %s6
  %s9 = scalar_select 0, %s8, %s6
  $region1: #{tpu_custom_call.1} parent=0
    #allocation2 [shape = 'u8[4096]{0}', space=vmem, size = 0x1000, scoped, tag = 'output window, operand 0, single buffered']
    #allocation3 [shape = 's32[1]{0}', space=sflag, size = 0x4, scoped, tag = 'scoped memory for tpu_custom_call.1']
    %10 = vsyncpa [#allocation3], 0
    // Predicated region
    $region2: #{tpu_custom_call.1} parent=1 // pred_check
      _
    $region3: #{tpu_custom_call.1} parent=1 // pred_check_branch
      %12 = sbr.rel (0) target = $region5
    $region4: #{tpu_custom_call.1} parent=1 // pred_region
      _
    $region5: #{tpu_custom_call.1} parent=1 // pred_fallthru
      _
    // Predicated region
    $region6: #{tpu_custom_call.1} parent=1 // pred_check
      _
    $region7: #{tpu_custom_call.1} parent=1 // pred_check_branch
      %14 = sbr.rel (0) target = $region9
    $region8: #{tpu_custom_call.1} parent=1 // pred_region
      _
    $region9: #{tpu_custom_call.1} parent=1 // pred_fallthru
      _
    // Predicated region
    $region10: #{tpu_custom_call.1} parent=1 // pred_check
      _
    $region11: #{tpu_custom_call.1} parent=1 // pred_check_branch
      %16 = sbr.rel (0) target = $region13
    $region12: #{tpu_custom_call.1} parent=1 // pred_region
      _
    $region13: #{tpu_custom_call.1} parent=1 // pred_fallthru
      _
    // Predicated region
    $region14: #{tpu_custom_call.1} parent=1 // pred_check
      _
    $region15: #{tpu_custom_call.1} parent=1 // pred_check_branch
      %18 = sbr.rel (0) target = $region17
    $region16: #{tpu_custom_call.1} parent=1 // pred_region
      _
    $region17: #{tpu_custom_call.1} parent=1 // pred_fallthru
      _
    // Predicated region
    $region18: #{tpu_custom_call.1} parent=1 // pred_check
      _
    $region19: #{tpu_custom_call.1} parent=1 // pred_check_branch
      %20 = sbr.rel (0) target = $region21
    $region20: #{tpu_custom_call.1} parent=1 // pred_region
      _
    $region21: #{tpu_custom_call.1} parent=1 // pred_fallthru
      _
    %v21 = vld [vmem:[%s0] sm:$0xff]
    %v22 = vld [vmem:[%s1] sm:$0xff]
    %v23 = vld [vmem:[%s1 + $0x8] sm:$0xff]
    %v24 = vld [vmem:[%s1 + $0x10] sm:$0xff]
    %v25 = vld [vmem:[%s1 + $0x18] sm:$0xff]
    %v26 = vld [vmem:[%s2] sm:$0x1]
    %v28 = vlaneseq
    %v29 = vshrl.u32 %v28, 7
    %v30 = vsub.s32 0, %v29
    %v31 = vrot.slane %v26, %v30
    %vm33 = vcmask 261120
    %v35 = vsel %vm33, %v21, 0
    %37 = vmatprep.subr.mxu0 0.0
    %38 = vmatpush1.msra.mxu0 %v22
    %39 = vmatprep.subr.mxu0 0.0
    %40 = vmatpush1.msra.mxu0 %v23
    %41 = vmatprep.subr.mxu0 0.0
    %42 = vmatpush1.msra.mxu0 %v24
    %43 = vmatprep.subr.mxu0 0.0
    %44 = vmatpush1.msra.mxu0 %v25
    %45 = vmatprep.subr.mxu0 0.0
    %46 = vmatpush1.msra.mxu0 0.0
    %47 = vmatprep.subr.mxu0 0.0
    %48 = vmatpush1.msra.mxu0 0.0
    %49 = vmatprep.subr.mxu0 0.0
    %50 = vmatpush1.msra.mxu0 0.0
    %51 = vmatprep.subr.mxu0 0.0
    %52 = vmatpush1.msra.mxu0 0.0
    %53 = vmatprep.subr.mxu0 0.0
    %54 = vmatpush1.msra.mxu0 0.0
    %55 = vmatprep.subr.mxu0 0.0
    %56 = vmatpush1.msra.mxu0 0.0
    %57 = vmatprep.subr.mxu0 0.0
    %58 = vmatpush1.msra.mxu0 0.0
    %59 = vmatprep.subr.mxu0 0.0
    %60 = vmatpush1.msra.mxu0 0.0
    %61 = vmatprep.subr.mxu0 0.0
    %62 = vmatpush1.msra.mxu0 0.0
    %63 = vmatprep.subr.mxu0 0.0
    %64 = vmatpush1.msra.mxu0 0.0
    %65 = vmatprep.subr.mxu0 0.0
    %66 = vmatpush1.msra.mxu0 0.0
    %67 = vmatprep.subr.mxu0 0.0
    %68 = vmatpush1.msra.mxu0 0.0
    %69 = vmatprep.subr.mxu0 0.0
    %70 = vmatpush1.msra.mxu0 0.0
    %71 = vmatprep.subr.mxu0 0.0
    %72 = vmatpush1.msra.mxu0 0.0
    %73 = vmatprep.subr.mxu0 0.0
    %74 = vmatpush1.msra.mxu0 0.0
    %75 = vmatprep.subr.mxu0 0.0
    %76 = vmatpush1.msra.mxu0 0.0
    %77 = vmatprep.subr.mxu0 0.0
    %78 = vmatpush1.msra.mxu0 0.0
    %79 = vmatprep.subr.mxu0 0.0
    %80 = vmatpush1.msra.mxu0 0.0
    %81 = vmatprep.subr.mxu0 0.0
    %82 = vmatpush1.msra.mxu0 0.0
    %83 = vmatprep.subr.mxu0 0.0
    %84 = vmatpush1.msra.mxu0 0.0
    %85 = vmatprep.subr.mxu0 0.0
    %86 = vmatpush1.msra.mxu0 0.0
    %87 = vmatprep.subr.mxu0 0.0
    %88 = vmatpush1.msra.mxu0 0.0
    %89 = vmatprep.subr.mxu0 0.0
    %90 = vmatpush1.msra.mxu0 0.0
    %91 = vmatprep.subr.mxu0 0.0
    %92 = vmatpush1.msra.mxu0 0.0
    %93 = vmatprep.subr.mxu0 0.0
    %94 = vmatpush1.msra.mxu0 0.0
    %95 = vmatprep.subr.mxu0 0.0
    %96 = vmatpush1.msra.mxu0 0.0
    %97 = vmatprep.subr.mxu0 0.0
    %98 = vmatpush1.msra.mxu0 0.0
    %99 = vmatprep.subr.mxu0 0.0
    %100 = vmatpush1.msra.mxu0 0.0
    %101 = vmatprep.mubr.f32.mxu0 0.0
    %102 = vmatmul.mubr.f32.gmra.mrb[0].mxu0 %v35
    %v103 = vpop.f32.mrb[0].mxu0
    %v104 = vadd.f32 %v31, %v103
    %v105 = vpop.f32.mrb[0].mxu0
    %106 = vdwg.mxu0
    %v107 = vmax.f32 %v104, 0.0
    %v108 = vld [vmem:[%s3] sm:$0xff]
    %v109 = vld [vmem:[%s3 + $0x8] sm:$0xff]
    %v110 = vld [vmem:[%s3 + $0x10] sm:$0xff]
    %v111 = vld [vmem:[%s3 + $0x18] sm:$0xff]
    %v112 = vld [vmem:[%s3 + $0x20] sm:$0xff]
    %v113 = vld [vmem:[%s3 + $0x28] sm:$0xff]
    %v114 = vld [vmem:[%s3 + $0x30] sm:$0xff]
    %v115 = vld [vmem:[%s3 + $0x38] sm:$0xff]
    %v116 = vld [vmem:[%s3 + $0x40] sm:$0xff]
    %v117 = vld [vmem:[%s3 + $0x48] sm:$0xff]
    %v118 = vld [vmem:[%s3 + $0x50] sm:$0xff]
    %v119 = vld [vmem:[%s3 + $0x58] sm:$0xff]
    %v120 = vld [vmem:[%s3 + $0x60] sm:$0xff]
    %v121 = vld [vmem:[%s3 + $0x68] sm:$0xff]
    %v122 = vld [vmem:[%s3 + $0x70] sm:$0xff]
    %v123 = vld [vmem:[%s3 + $0x78] sm:$0xff]
    %v124 = vld [vmem:[%s4] sm:$0x1]
    %v126 = vlaneseq
    %v127 = vshrl.u32 %v126, 7
    %v128 = vsub.s32 0, %v127
    %v129 = vrot.slane %v124, %v128
    %131 = vmatprep.subr.mxu0 0.0
    %132 = vmatpush1.msra.mxu0 %v108
    %133 = vmatprep.subr.mxu0 0.0
    %134 = vmatpush1.msra.mxu0 %v109
    %135 = vmatprep.subr.mxu0 0.0
    %136 = vmatpush1.msra.mxu0 %v110
    %137 = vmatprep.subr.mxu0 0.0
    %138 = vmatpush1.msra.mxu0 %v111
    %139 = vmatprep.subr.mxu0 0.0
    %140 = vmatpush1.msra.mxu0 %v112
    %141 = vmatprep.subr.mxu0 0.0
    %142 = vmatpush1.msra.mxu0 %v113
    %143 = vmatprep.subr.mxu0 0.0
    %144 = vmatpush1.msra.mxu0 %v114
    %145 = vmatprep.subr.mxu0 0.0
    %146 = vmatpush1.msra.mxu0 %v115
    %147 = vmatprep.subr.mxu0 0.0
    %148 = vmatpush1.msra.mxu0 %v116
    %149 = vmatprep.subr.mxu0 0.0
    %150 = vmatpush1.msra.mxu0 %v117
    %151 = vmatprep.subr.mxu0 0.0
    %152 = vmatpush1.msra.mxu0 %v118
    %153 = vmatprep.subr.mxu0 0.0
    %154 = vmatpush1.msra.mxu0 %v119
    %155 = vmatprep.subr.mxu0 0.0
    %156 = vmatpush1.msra.mxu0 %v120
    %157 = vmatprep.subr.mxu0 0.0
    %158 = vmatpush1.msra.mxu0 %v121
    %159 = vmatprep.subr.mxu0 0.0
    %160 = vmatpush1.msra.mxu0 %v122
    %161 = vmatprep.subr.mxu0 0.0
    %162 = vmatpush1.msra.mxu0 %v123
    %163 = vmatprep.subr.mxu0 0.0
    %164 = vmatpush1.msra.mxu0 0.0
    %165 = vmatprep.subr.mxu0 0.0
    %166 = vmatpush1.msra.mxu0 0.0
    %167 = vmatprep.subr.mxu0 0.0
    %168 = vmatpush1.msra.mxu0 0.0
    %169 = vmatprep.subr.mxu0 0.0
    %170 = vmatpush1.msra.mxu0 0.0
    %171 = vmatprep.subr.mxu0 0.0
    %172 = vmatpush1.msra.mxu0 0.0
    %173 = vmatprep.subr.mxu0 0.0
    %174 = vmatpush1.msra.mxu0 0.0
    %175 = vmatprep.subr.mxu0 0.0
    %176 = vmatpush1.msra.mxu0 0.0
    %177 = vmatprep.subr.mxu0 0.0
    %178 = vmatpush1.msra.mxu0 0.0
    %179 = vmatprep.subr.mxu0 0.0
    %180 = vmatpush1.msra.mxu0 0.0
    %181 = vmatprep.subr.mxu0 0.0
    %182 = vmatpush1.msra.mxu0 0.0
    %183 = vmatprep.subr.mxu0 0.0
    %184 = vmatpush1.msra.mxu0 0.0
    %185 = vmatprep.subr.mxu0 0.0
    %186 = vmatpush1.msra.mxu0 0.0
    %187 = vmatprep.subr.mxu0 0.0
    %188 = vmatpush1.msra.mxu0 0.0
    %189 = vmatprep.subr.mxu0 0.0
    %190 = vmatpush1.msra.mxu0 0.0
    %191 = vmatprep.subr.mxu0 0.0
    %192 = vmatpush1.msra.mxu0 0.0
    %193 = vmatprep.subr.mxu0 0.0
    %194 = vmatpush1.msra.mxu0 0.0
    %195 = vmatprep.mubr.f32.mxu0 0.0
    %196 = vmatmul.mubr.f32.gmra.mrb[0].mxu0 %v107
    %v197 = vpop.f32.mrb[0].mxu0
    %v198 = vadd.f32 %v129, %v197
    %v199 = vpop.f32.mrb[0].mxu0
    %200 = vdwg.mxu0
    %v201 = vlaneseq
    %v202 = vand.u32 %v201, 127
    %vm203 = vcmp.lt.s32.totalorder %v202, 4
    %v204 = vsel %vm203, %v198, -inf
    %vm205 = vcmask 39936
    %v206 = vsel %vm205, %v204, -inf
    %207 = vmax.xlane.f32.xlu0 %v206
    %v208 = vpop.xlane.xlu0 %207
    %v209 = vsub.f32 %v198, %v208
    %v210 = vmul.f32 %v209, 1.442695
    %v211 = vpow.pop %v210
    %v212 = vsel %vm203, %v211, 0.0
    %v213 = vsel %vm205, %v212, 0.0
    %214 = vadd.xlane.f32.xlu0 %v213
    %v215 = vpop.xlane.xlu0 %214
    %v216 = vrcp.pop %v215
    %v217 = vmul.f32 %v212, %v216
    %v218 = vsel %vm203, %v217, %v198
    %219 = vxpose.xlu0.b32.start [1/16] %v218, 128
    %220 = vxpose.xlu0.b32.cont [2/16] 0.0, 128
    %221 = vxpose.xlu0.b32.cont [3/16] 0.0, 128
    %222 = vxpose.xlu0.b32.cont [4/16] 0.0, 128
    %223 = vxpose.xlu0.b32.cont [5/16] 0.0, 128
    %224 = vxpose.xlu0.b32.cont [6/16] 0.0, 128
    %225 = vxpose.xlu0.b32.cont [7/16] 0.0, 128
    %226 = vxpose.xlu0.b32.cont [8/16] 0.0, 128
    %227 = vxpose.xlu0.b32.cont [9/16] 0.0, 128
    %228 = vxpose.xlu0.b32.cont [10/16] 0.0, 128
    %229 = vxpose.xlu0.b32.cont [11/16] 0.0, 128
    %230 = vxpose.xlu0.b32.cont [12/16] 0.0, 128
    %231 = vxpose.xlu0.b32.cont [13/16] 0.0, 128
    %232 = vxpose.xlu0.b32.cont [14/16] 0.0, 128
    %233 = vxpose.xlu0.b32.cont [15/16] 0.0, 128
    %234 = vxpose.xlu0.b32.end [16/16] 0.0, 128
    %v235 = vpop.trf.xlu0
    %v236 = vpop.trf.xlu0
    %v237 = vpop.trf.xlu0
    %v238 = vpop.trf.xlu0
    %v239 = vpop.trf.xlu0
    %v240 = vpop.trf.xlu0
    %v241 = vpop.trf.xlu0
    %v242 = vpop.trf.xlu0
    %v243 = vpop.trf.xlu0
    %v244 = vpop.trf.xlu0
    %v245 = vpop.trf.xlu0
    %v246 = vpop.trf.xlu0
    %v247 = vpop.trf.xlu0
    %v248 = vpop.trf.xlu0
    %v249 = vpop.trf.xlu0
    %v250 = vpop.trf.xlu0
    %vm251 = vcmask 61440
    %252 = vst.msk [vmem:[#allocation2] sm:$0x1f] %vm251, %v235
    // Predicated region
    $region22: #{tpu_custom_call.1} parent=1 // pred_check
      _
    $region23: #{tpu_custom_call.1} parent=1 // pred_check_branch
      %254 = sbr.rel (0) target = $region25
    $region24: #{tpu_custom_call.1} parent=1 // pred_region
      %s256 = ssub.s32 128, 128
      %257 = vsyncadd [#allocation3], %s256
      %s259 = sshll.u32 [#allocation2], 4
      %s260 = int_to_ptr.vmem [resolvable:$true] %s259
      %262 = dma.vmem_to_hbm [thread:$0]  %s260, 128, %s5, [#allocation3]
    $region25: #{tpu_custom_call.1} parent=1 // pred_fallthru
      _
    // Predicated region
    $region26: #{tpu_custom_call.1} parent=1 // pred_check
      _
    $region27: #{tpu_custom_call.1} parent=1 // pred_check_branch
      %264 = sbr.rel (0) target = $region29
    $region28: #{tpu_custom_call.1} parent=1 // pred_region
      %265 = dma.done [#allocation3], 128
    $region29: #{tpu_custom_call.1} parent=1 // pred_fallthru
      _
    %266 = vsyncpa [#allocation3], 1

</llo_original>
